<compile_context>
chip_gen: v6e
topology: v6e:2x2x1
jax: 0.10.0
libtpu: 0.0.40
codegen_flags: <defaults>
</compile_context>

<pallas_src>
import math

import jax
import jax.numpy as jnp
from jax.experimental import pallas as pl
from jax.experimental.pallas import tpu as pltpu


# --------------------------------------------------------------------------
# image_grid.clone(): flat, lane-dense tiled copy
# --------------------------------------------------------------------------
def _copy_kernel(src_ref, dst_ref):
    dst_ref[...] = src_ref[...]


# Minimum sublane tile per element size (sub-32-bit dtypes pack along sublanes).
_SUBLANE_TILE = {4: 8, 2: 16, 1: 32}


def clone_image(x,
                block_budget_bytes=4 * 1024 * 1024,
                vmem_limit_bytes=32 * 1024 * 1024):
    """torch-style .clone(): returns a fresh copy of x (any shape / dtype)."""
    shape = x.shape
    dtype = x.dtype
    itemsize = jnp.dtype(dtype).itemsize
    total = math.prod(shape)
    sub_tile = _SUBLANE_TILE.get(itemsize, 8)

    # Pick a lane width (multiple of 128) dividing the flattened length, preferring
    # one that leaves >= sub_tile rows so sublanes are not wasted.
    lane = None
    for prefer_rows in (True, False):
        for cand in (2048, 1024, 512, 256, 128):
            if total % cand == 0 and (not prefer_rows or total // cand >= sub_tile):
                lane = cand
                break
        if lane is not None:
            break

    if lane is None:
        # TODO(synk): flattened length not a multiple of 128 (e.g. odd H*W*C*B);
        # fall back to a whole-tensor single-block copy (fine for small tensors).
        return pl.pallas_call(
            _copy_kernel,
            out_shape=jax.ShapeDtypeStruct(shape, dtype),
            compiler_params=pltpu.CompilerParams(
                vmem_limit_bytes=vmem_limit_bytes),
        )(x)

    rows = total // lane
    flat = x.reshape(rows, lane)   # contiguous reshape: metadata only, no HBM traffic

    # Row tile: multiple of the dtype's sublane tile, under the block budget.
    budget_rows = block_budget_bytes // (lane * itemsize)
    tr = max(sub_tile, (budget_rows // sub_tile) * sub_tile)
    tr = min(tr, rows)
    if tr >= rows and rows >= 2 * sub_tile:
        # Keep >= 2 parallel grid steps so a v7x chip can shard the copy across
        # both TensorCores (still within the block budget).
        tr = ((pl.cdiv(rows, 2) + sub_tile - 1) // sub_tile) * sub_tile
    if tr < rows and tr % sub_tile != 0:
        tr = max(sub_tile, (tr // sub_tile) * sub_tile)

    grid = (pl.cdiv(rows, tr),)
    out_flat = pl.pallas_call(
        _copy_kernel,
        out_shape=jax.ShapeDtypeStruct((rows, lane), dtype),
        grid=grid,
        in_specs=[pl.BlockSpec((tr, lane), lambda i: (i, 0))],
        out_specs=pl.BlockSpec((tr, lane), lambda i: (i, 0)),
        compiler_params=pltpu.CompilerParams(
            dimension_semantics=("parallel",),
            vmem_limit_bytes=vmem_limit_bytes),
    )(flat)
    return out_flat.reshape(shape)


# --------------------------------------------------------------------------
# Project3D (standalone, NOT part of the forward — the torch forward discards it):
#   pix = points @ K^T ;  uv = pix_xy / (pix_z + eps)  -> [B, 2, N]
# (With the module's default T, rotation = I and translation = 0.)
# --------------------------------------------------------------------------
def _project3d_kernel(k_ref, pts_ref, out_ref, *, eps):
    # k_ref:   SMEM [3, 3]      camera intrinsics
    # pts_ref: VMEM [B, N, 3]   points (original layout, transposed in-kernel)
    # out_ref: VMEM [B, 2, N]
    pts = pts_ref[...]                       # [B, N, 3]
    px = pts[:, :, 0]                        # [B, N]
    py = pts[:, :, 1]
    pz = pts[:, :, 2]

    k00 = k_ref[0, 0]; k01 = k_ref[0, 1]; k02 = k_ref[0, 2]
    k10 = k_ref[1, 0]; k11 = k_ref[1, 1]; k12 = k_ref[1, 2]
    k20 = k_ref[2, 0]; k21 = k_ref[2, 1]; k22 = k_ref[2, 2]

    xc = px * k00 + py * k01 + pz * k02      # [B, N]
    yc = px * k10 + py * k11 + pz * k12
    zc = px * k20 + py * k21 + pz * k22

    inv = 1.0 / (zc + eps)                   # exact divide: matches torch
    out_ref[:, 0:1, :] = (xc * inv)[:, None, :]
    out_ref[:, 1:2, :] = (yc * inv)[:, None, :]


def project_3d(query_points, intrinsics, eps=1e-7):
    """query_points: [B, N, 3], intrinsics: [3, 3] -> [B, 2, N] (torch Project3D)."""
    import functools
    B, N, _ = query_points.shape
    pts = query_points.astype(jnp.float32)            # cast only; no layout change
    k = jnp.asarray(intrinsics, dtype=jnp.float32)
    kernel = functools.partial(_project3d_kernel, eps=eps)
    return pl.pallas_call(
        kernel,
        out_shape=jax.ShapeDtypeStruct((B, 2, N), jnp.float32),
        in_specs=[
            pl.BlockSpec(memory_space=pltpu.MemorySpace.SMEM),   # K [3, 3]
            pl.BlockSpec(memory_space=pltpu.MemorySpace.VMEM),   # points [B, N, 3]
        ],
        out_specs=pl.BlockSpec(memory_space=pltpu.MemorySpace.VMEM),
    )(k, pts)


# --------------------------------------------------------------------------
# Full forward (mirrors torch ProjectColorOntoImage_v3.forward)
# --------------------------------------------------------------------------
def project_color_onto_image_v3_forward(image_grid, query_points, query_colors,
                                        intrinsics, eps=1e-7):
    """image_grid [B,C,H,W], query_points [B,N,3], query_colors [B,N,3],
    intrinsics [3,3] -> [B, C, H, W].

    The torch forward computes a projection and a pixel meshgrid and discards both,
    returning image_grid.clone(); the dead compute is dropped here (XLA would DCE it
    under jit anyway) and the forward is exactly the clone.
    """
    del query_points, query_colors, intrinsics, eps   # unused by the torch forward
    # TODO(synk): the torch module never writes the projected colors into the image;
    # the returned value is an unmodified clone of image_grid, reproduced exactly here.
    return clone_image(image_grid)


# --------------------------------------------------------------------------
# Pure-JAX reference for the Project3D sub-kernel
# --------------------------------------------------------------------------
def reference_project3d(query_points, K, eps=1e-7):
    pts = query_points.astype(jnp.float32)
    pix = jnp.einsum('bnk,jk->bnj', pts, jnp.asarray(K, jnp.float32))   # points @ K^T
    uv = pix[..., :2] / (pix[..., 2:3] + eps)                           # [B, N, 2]
    return jnp.transpose(uv, (0, 2, 1))                                 # [B, 2, N]


if __name__ == "__main__":
    B, C, H, W, N = 2, 4, 16, 16, 8
    key = jax.random.PRNGKey(0)
    k_img, k_xy, k_z, k_col = jax.random.split(key, 4)

    image_grid = jax.random.normal(k_img, (B, C, H, W), dtype=jnp.float32)
    xy = jax.random.uniform(k_xy, (B, N, 2), minval=-1.5, maxval=1.5)
    z = jax.random.uniform(k_z, (B, N, 1), minval=1.0, maxval=2.0)
    query_points = jnp.concatenate([xy, z], axis=-1)                    # [B, N, 3]
    query_colors = jax.random.uniform(k_col, (B, N, 3))                 # unused

    intrinsics = jnp.array([[8.0, 0.0, (W - 1) / 2.0],
                            [0.0, 8.0, (H - 1) / 2.0],
                            [0.0, 0.0, 1.0]], dtype=jnp.float32)

    out = project_color_onto_image_v3_forward(
        image_grid, query_points, query_colors, intrinsics)
    out = jax.block_until_ready(out)

    # Forward semantics: an exact clone of image_grid.
    assert out.shape == (B, C, H, W), out.shape
    assert out.dtype == image_grid.dtype
    assert bool(jnp.array_equal(out, image_grid)), "clone output mismatch"

    # Validate the standalone Project3D kernel (the module computes & discards this).
    pix = jax.block_until_ready(project_3d(query_points, intrinsics))
    pix_ref = reference_project3d(query_points, intrinsics)
    assert pix.shape == (B, 2, N), pix.shape
    assert bool(jnp.allclose(pix, pix_ref, atol=1e-5, rtol=1e-5)), \
        "Project3D mismatch vs pure-JAX reference"

    print("KERNEL_OK")
</pallas_src>

<mosaic_0001>
module attributes {stable_mosaic.version = 11 : i64} {
  func.func @_copy_kernel(%arg0: i32, %arg1: memref<8x256xf32, #tpu.memory_space<vmem>>, %arg2: memref<8x256xf32, #tpu.memory_space<vmem>>) attributes {dimension_semantics = [#tpu.dimension_semantics<parallel>], iteration_bounds = array<i64: 1>, scalar_prefetch = 0 : i64, scratch_operands = 0 : i64, tpu.core_type = #tpu.core_type<tc>, window_params = [{transform_indices = @transform_0, window_bounds = array<i64: 8, 256>}, {transform_indices = @transform_1, window_bounds = array<i64: 8, 256>}]} {
    %c0 = arith.constant 0 : index
    %c0_0 = arith.constant 0 : index
    %0 = vector.load %arg1[%c0, %c0_0] : memref<8x256xf32, #tpu.memory_space<vmem>>, vector<8x256xf32>
    %c0_1 = arith.constant 0 : index
    %c0_2 = arith.constant 0 : index
    %1 = vector.load %arg2[%c0_1, %c0_2] : memref<8x256xf32, #tpu.memory_space<vmem>>, vector<8x256xf32>
    tpu.vector_store %arg2[%c0_1, %c0_2], %0 {strides = array<i32>} : memref<8x256xf32, #tpu.memory_space<vmem>>, vector<8x256xf32>,
    return
  }
  func.func @transform_0(%arg0: i32) -> (i32, i32) {
    %c0_i32 = arith.constant 0 : i32
    %c0_i32_0 = arith.constant 0 : i32
    return %arg0, %c0_i32 : i32, i32
  }
  func.func @transform_1(%arg0: i32) -> (i32, i32) {
    %c0_i32 = arith.constant 0 : i32
    %c0_i32_0 = arith.constant 0 : i32
    return %arg0, %c0_i32 : i32, i32
  }
}

</mosaic_0001>

<llo_original>
// kernel: tpu_custom_call.1
$region0: #{tpu_custom_call.1}
  #allocation0 [shape = 'u32[]', space=smem, size = 0x4, offset = 0x4, fixed_abs, tag = 'smem constant byte address 0x4 - core index']
  #allocation1 [shape = 'u32[144,128]{1,0:T(1,128)}', space=vmem, size = 0x12000, scoped, tag = 'internal scratch']
  %s0 = inlined_call_operand.hbm [shape: f32[8,256], index: 0, kind: input, shape index: {}]
  %s1 = inlined_call_operand.hbm [shape: f32[8,256], index: 1, kind: output, shape index: {}]
  %s2 = sld [smem:[#allocation0]]
  $region18: #{tpu_custom_call.1} parent=0
    _
  %s4 = ssub.s32 1, %s2
  %s5 = scalar_select 0, %s4, %s2
  $region1: #{tpu_custom_call.1} parent=0
    #allocation2 [shape = 'u8[8192]{0}', space=vmem, size = 0x2000, scoped, tag = 'input window, operand 0, single buffered']
    #allocation3 [shape = 's32[1]{0}', space=sflag, size = 0x4, scoped, tag = 'scoped memory for tpu_custom_call.1']
    #allocation4 [shape = 's32[1]{0}', space=sflag, size = 0x4, scoped, tag = 'scoped memory for tpu_custom_call.1']
    #allocation5 [shape = 'u8[8192]{0}', space=vmem, size = 0x2000, scoped, tag = 'output window, operand 0, single buffered']
    %6 = vsyncpa [#allocation3], 0
    %7 = vsyncpa [#allocation4], 0
    // Predicated region
    $region2: #{tpu_custom_call.1} parent=1 // pred_check
      _
    $region3: #{tpu_custom_call.1} parent=1 // pred_check_branch
      %9 = sbr.rel (0) target = $region5
    $region4: #{tpu_custom_call.1} parent=1 // pred_region
      %s11 = ssub.s32 256, 256
      %12 = vsyncadd [#allocation3], %s11
      %s14 = sshll.u32 [#allocation2], 4
      %s15 = int_to_ptr.vmem [resolvable:$true] %s14
      %17 = dma.hbm_to_vmem [thread:$0]  %s0, 256, %s15, [#allocation3]
    $region5: #{tpu_custom_call.1} parent=1 // pred_fallthru
      _
    // Predicated region
    $region6: #{tpu_custom_call.1} parent=1 // pred_check
      _
    $region7: #{tpu_custom_call.1} parent=1 // pred_check_branch
      %19 = sbr.rel (0) target = $region9
    $region8: #{tpu_custom_call.1} parent=1 // pred_region
      %20 = dma.done [#allocation3], 256
    $region9: #{tpu_custom_call.1} parent=1 // pred_fallthru
      _
    %v21 = vld [vmem:[#allocation2] sm:$0xff]
    %v22 = vld [vmem:[#allocation2 + $0x8] sm:$0xff]
    %23 = vst [vmem:[#allocation5] sm:$0xff] %v21
    %24 = vst [vmem:[#allocation5 + $0x8] sm:$0xff] %v22
    // Predicated region
    $region10: #{tpu_custom_call.1} parent=1 // pred_check
      _
    $region11: #{tpu_custom_call.1} parent=1 // pred_check_branch
      %26 = sbr.rel (0) target = $region13
    $region12: #{tpu_custom_call.1} parent=1 // pred_region
      %s28 = ssub.s32 256, 256
      %29 = vsyncadd [#allocation4], %s28
      %s31 = sshll.u32 [#allocation5], 4
      %s32 = int_to_ptr.vmem [resolvable:$true] %s31
      %34 = dma.vmem_to_hbm [thread:$0]  %s32, 256, %s1, [#allocation4]
    $region13: #{tpu_custom_call.1} parent=1 // pred_fallthru
      _
    // Predicated region
    $region14: #{tpu_custom_call.1} parent=1 // pred_check
      _
    $region15: #{tpu_custom_call.1} parent=1 // pred_check_branch
      %36 = sbr.rel (0) target = $region17
    $region16: #{tpu_custom_call.1} parent=1 // pred_region
      %37 = dma.done [#allocation4], 256
    $region17: #{tpu_custom_call.1} parent=1 // pred_fallthru
      _
    %38 = vsyncpa [#allocation3], 1
    %39 = vsyncpa [#allocation4], 1

</llo_original>
